<compile_context>
chip_gen: v5e
topology: v5e:2x2
jax: 0.10.0
libtpu: 0.0.40
codegen_flags: <defaults>
</compile_context>

<pallas_src>
import math

import jax
import jax.numpy as jnp
from jax.experimental import pallas as pl
from jax.experimental.pallas import tpu as pltpu


def _flatten_copy_kernel(x_ref, o_ref):
    # Pure copy of the current (block_rows, 128) tile: one vld + one unmasked
    # lane-dense vst per vreg; the pipeline is entirely HBM-bandwidth bound.
    o_ref[...] = x_ref[...]


def _sublane_multiple(dtype):
    # Sublane packing factor: 8 for 4-byte, 16 for 2-byte, 32 for 1-byte dtypes.
    itemsize = jnp.dtype(dtype).itemsize
    return max(8, 32 // max(itemsize, 1))


def flatten_layer(x, *, target_block_bytes=2 * 1024 * 1024, copy=True):
    """Pallas equivalent of FlattenLayer.forward: x.view(x.shape[0], -1)."""
    b = x.shape[0]
    d = math.prod(x.shape[1:]) if len(x.shape) > 1 else 1
    x2d = jnp.reshape(x, (b, d))  # metadata-only (row-major == torch .view)

    if not copy:
        # Optimal path: flatten is free; no HBM traffic at all.
        return x2d

    total = b * d
    itemsize = jnp.dtype(x.dtype).itemsize
    sub = _sublane_multiple(x.dtype)

    # Unaligned or degenerate sizes: the reshape already *is* the answer; a
    # copy kernel here would only add masked partial stores / VMEM risk.
    if total == 0 or total % (128 * sub) != 0:
        return x2d

    rows = total // 128
    flat = jnp.reshape(x2d, (rows, 128))  # still metadata-only

    # Largest block (multiple of `sub` rows) whose tile is <= target_block_bytes,
    # and that divides `rows` cleanly when possible to avoid a ragged tail tile.
    max_rows = max(sub, (target_block_bytes // (128 * itemsize)) // sub * sub)
    block_rows = min(rows, max_rows)
    grid = (pl.cdiv(rows, block_rows),)

    out_flat = pl.pallas_call(
        _flatten_copy_kernel,
        out_shape=jax.ShapeDtypeStruct((rows, 128), x.dtype),
        grid_spec=pltpu.PrefetchScalarGridSpec(
            num_scalar_prefetch=0,
            grid=grid,
            in_specs=[pl.BlockSpec((block_rows, 128), lambda i: (i, 0))],
            out_specs=pl.BlockSpec((block_rows, 128), lambda i: (i, 0)),
        ),
        compiler_params=pltpu.CompilerParams(
            dimension_semantics=("parallel",),
        ),
    )(flat)

    return jnp.reshape(out_flat, (b, d))


if __name__ == "__main__":
    key = jax.random.PRNGKey(0)
    k0, k1, k2, k3 = jax.random.split(key, 4)

    # 1) Small NCHW feature map (kernel path, single lane-dense block).
    x = jax.random.normal(k0, (2, 4, 16, 16), dtype=jnp.float32)
    y = jax.block_until_ready(flatten_layer(x))
    y_ref = jnp.reshape(x, (x.shape[0], -1))
    assert y.shape == (2, 4 * 16 * 16), y.shape
    assert jnp.array_equal(y, y_ref), "flatten mismatch (f32, single block)"

    # 2) Multi-step grid: small block target forces several grid iterations.
    x2 = jax.random.normal(k1, (2, 8, 32, 32), dtype=jnp.float32)
    y2 = jax.block_until_ready(flatten_layer(x2, target_block_bytes=16 * 1024))
    assert jnp.array_equal(y2, jnp.reshape(x2, (2, -1))), "flatten mismatch (multi-block)"

    # 3) Sub-32-bit dtype (bf16 -> 16-row sublane multiple).
    x3 = jax.random.normal(k2, (2, 8, 16, 16), dtype=jnp.bfloat16)
    y3 = jax.block_until_ready(flatten_layer(x3))
    assert jnp.array_equal(y3, jnp.reshape(x3, (2, -1))), "flatten mismatch (bf16)"

    # 4) Unaligned total -> metadata-only fallback (no masked stores).
    x4 = jax.random.normal(k3, (2, 3, 5, 7), dtype=jnp.float32)
    y4 = jax.block_until_ready(flatten_layer(x4))
    assert jnp.array_equal(y4, jnp.reshape(x4, (2, -1))), "flatten mismatch (fallback)"

    print("KERNEL_OK")
</pallas_src>

<mosaic_0001>
module attributes {stable_mosaic.version = 11 : i64} {
  func.func @_flatten_copy_kernel(%arg0: i32, %arg1: memref<16x128xf32, #tpu.memory_space<vmem>>, %arg2: memref<16x128xf32, #tpu.memory_space<vmem>>) attributes {dimension_semantics = [#tpu.dimension_semantics<parallel>], iteration_bounds = array<i64: 1>, scalar_prefetch = 0 : i64, scratch_operands = 0 : i64, tpu.core_type = #tpu.core_type<tc>, window_params = [{transform_indices = @transform_0, window_bounds = array<i64: 16, 128>}, {transform_indices = @transform_1, window_bounds = array<i64: 16, 128>}]} {
    %c0 = arith.constant 0 : index
    %c0_0 = arith.constant 0 : index
    %0 = vector.load %arg1[%c0, %c0_0] : memref<16x128xf32, #tpu.memory_space<vmem>>, vector<16x128xf32>
    %c0_1 = arith.constant 0 : index
    %c0_2 = arith.constant 0 : index
    %1 = vector.load %arg2[%c0_1, %c0_2] : memref<16x128xf32, #tpu.memory_space<vmem>>, vector<16x128xf32>
    tpu.vector_store %arg2[%c0_1, %c0_2], %0 {strides = array<i32>} : memref<16x128xf32, #tpu.memory_space<vmem>>, vector<16x128xf32>,
    return
  }
  func.func @transform_0(%arg0: i32) -> (i32, i32) {
    %c0_i32 = arith.constant 0 : i32
    %c0_i32_0 = arith.constant 0 : i32
    return %arg0, %c0_i32 : i32, i32
  }
  func.func @transform_1(%arg0: i32) -> (i32, i32) {
    %c0_i32 = arith.constant 0 : i32
    %c0_i32_0 = arith.constant 0 : i32
    return %arg0, %c0_i32 : i32, i32
  }
}

</mosaic_0001>

<llo_original>
// kernel: tpu_custom_call.1
$region0: #{tpu_custom_call.1}
  #allocation0 [shape = 'u32[]', space=smem, size = 0x4, offset = 0x4, fixed_abs, tag = 'smem constant byte address 0x4 - core index']
  #allocation1 [shape = 'u32[72,128]{1,0:T(1,128)}', space=vmem, size = 0x9000, scoped, tag = 'internal scratch']
  %s0 = inlined_call_operand.hbm [shape: f32[16,128], index: 0, kind: input, shape index: {}]
  %s1 = inlined_call_operand.hbm [shape: f32[16,128], index: 1, kind: output, shape index: {}]
  %s2 = sld [smem:[#allocation0]]
  $region18: #{tpu_custom_call.1} parent=0
    _
  %s4 = ssub.s32 1, %s2
  %s5 = scalar_select 0, %s4, %s2
  $region1: #{tpu_custom_call.1} parent=0
    #allocation2 [shape = 'u8[8192]{0}', space=vmem, size = 0x2000, scoped, tag = 'input window, operand 0, single buffered']
    #allocation3 [shape = 's32[1]{0}', space=sflag, size = 0x4, scoped, tag = 'scoped memory for tpu_custom_call.1']
    #allocation4 [shape = 's32[1]{0}', space=sflag, size = 0x4, scoped, tag = 'scoped memory for tpu_custom_call.1']
    #allocation5 [shape = 'u8[8192]{0}', space=vmem, size = 0x2000, scoped, tag = 'output window, operand 0, single buffered']
    %6 = vsyncpa [#allocation3], 0
    %7 = vsyncpa [#allocation4], 0
    // Predicated region
    $region2: #{tpu_custom_call.1} parent=1 // pred_check
      _
    $region3: #{tpu_custom_call.1} parent=1 // pred_check_branch
      %9 = sbr.rel (0) target = $region5
    $region4: #{tpu_custom_call.1} parent=1 // pred_region
      %11 = vsyncadd [#allocation3], 0
      %s12 = sshll.u32 %s0, 4
      %s13 = int_to_ptr.hbm [resolvable:$true] %s12
      %s14 = sshll.u32 [#allocation2], 4
      %s15 = int_to_ptr.vmem [resolvable:$true] %s14
      %20 = dma.hbm_to_vmem [thread:$0]  %s13, 256, %s15, [#allocation3], 128, 128, 8
    $region5: #{tpu_custom_call.1} parent=1 // pred_fallthru
      _
    // Predicated region
    $region6: #{tpu_custom_call.1} parent=1 // pred_check
      _
    $region7: #{tpu_custom_call.1} parent=1 // pred_check_branch
      %22 = sbr.rel (0) target = $region9
    $region8: #{tpu_custom_call.1} parent=1 // pred_region
      %24 = dma.done [#allocation3], 256
    $region9: #{tpu_custom_call.1} parent=1 // pred_fallthru
      _
    %v25 = vld [vmem:[#allocation2] sm:$0xff]
    %v26 = vld [vmem:[#allocation2 + $0x8] sm:$0xff]
    %27 = vst [vmem:[#allocation5] sm:$0xff] %v25
    %28 = vst [vmem:[#allocation5 + $0x8] sm:$0xff] %v26
    // Predicated region
    $region10: #{tpu_custom_call.1} parent=1 // pred_check
      _
    $region11: #{tpu_custom_call.1} parent=1 // pred_check_branch
      %30 = sbr.rel (0) target = $region13
    $region12: #{tpu_custom_call.1} parent=1 // pred_region
      %32 = vsyncadd [#allocation4], 0
      %s33 = sshll.u32 [#allocation5], 4
      %s34 = int_to_ptr.vmem [resolvable:$true] %s33
      %s35 = sshll.u32 %s1, 4
      %s36 = int_to_ptr.hbm [resolvable:$true] %s35
      %41 = dma.vmem_to_hbm [thread:$0]  %s34, 256, %s36, [#allocation4], 128, 128, 8
    $region13: #{tpu_custom_call.1} parent=1 // pred_fallthru
      _
    // Predicated region
    $region14: #{tpu_custom_call.1} parent=1 // pred_check
      _
    $region15: #{tpu_custom_call.1} parent=1 // pred_check_branch
      %43 = sbr.rel (0) target = $region17
    $region16: #{tpu_custom_call.1} parent=1 // pred_region
      %45 = dma.done [#allocation4], 256
    $region17: #{tpu_custom_call.1} parent=1 // pred_fallthru
      _
    %46 = vsyncpa [#allocation3], 1
    %47 = vsyncpa [#allocation4], 1

</llo_original>
